<compile_context>
chip_gen: v7x
topology: tpu7x:2x2x1
jax: 0.10.0
libtpu: 0.0.40
codegen_flags: <defaults>
</compile_context>

<pallas_src>
import functools
import math

import jax
import jax.numpy as jnp
from jax.experimental import pallas as pl
from jax.experimental.pallas import tpu as pltpu

LN_EPS = 1e-5  # torch.nn.LayerNorm default


# ---------------------------------------------------------------------------
# hardware / tiling helpers
# ---------------------------------------------------------------------------
def _tpu_vmem_capacity_bytes(default=128 * 1024 * 1024):
    try:
        info = pltpu.get_tpu_info()
        cap = int(getattr(info, "vmem_capacity_bytes", 0))
        if cap > 0:
            return cap
    except Exception:
        pass
    return default


def _pick_row_tile(m, cap):
    """Kernel-1 row tile: multiple of 128 (lane-dense output store) dividing m."""
    if m % 128 != 0 or m <= 128:
        return m  # single full-array step (block == full dims is always legal)
    t = min(cap, m)
    t -= t % 128
    while t >= 128 and m % t != 0:
        t -= 128
    if t < 128:
        return m
    if t == m and m % 256 == 0:
        t = m // 2  # keep at least two grid steps so the pipeline is exercised
    return t


def _attn_vmem_estimate(tr, n, c_z, n_head, c_head):
    """Rough f32 VMEM footprint of one attention grid step (bytes)."""
    f32 = 4
    hc = n_head * c_head
    io_blocks = 2 * (2 * tr * n * c_z * f32)            # z + out, double-buffered
    bias = n_head * n * n * f32                         # resident, single buffer
    weights = (c_z * 4 * hc + 4 * hc + hc * c_z + 4 * c_z) * f32
    inter = (tr * n * c_z                                # zn
             + tr * n * 4 * hc                           # proj
             + 3 * tr * n * hc                           # q / k / v head-major
             + 2 * tr * n_head * n * n                   # scores + probabilities
             + 2 * tr * n * hc) * f32                    # o head-major + merged
    return io_blocks + bias + weights + inter


def _pick_attn_rows(n, c_z, n_head, c_head, vmem_budget):
    """Pair-matrix rows per attention grid step, derived from the VMEM budget.

    Prefers an even number of grid steps (v7x megacore balance) and at least
    two steps, then the largest tile that fits.
    """
    divisors = [d for d in range(1, n + 1) if n % d == 0]
    fits = [d for d in divisors
            if _attn_vmem_estimate(d, n, c_z, n_head, c_head) <= vmem_budget]
    if not fits:
        # TODO(synk): KV/bias tiling (online softmax) once even tr=1 overflows.
        fits = [1]

    def pref(d):
        steps = n // d
        return (steps % 2 == 0, steps >= 2, d)

    return max(fits, key=pref)


# ---------------------------------------------------------------------------
# Kernel 1: LayerNorm(z) . w_b  ->  head-major, lane-dense bias logits (H, M)
# ---------------------------------------------------------------------------
def _bias_proj_kernel(z_ref, ln_g_ref, ln_b_ref, w_bT_ref, b_ref):
    z = z_ref[...]
    mu = jnp.mean(z, axis=-1, keepdims=True)
    var = jnp.mean((z - mu) ** 2, axis=-1, keepdims=True)
    zn = (z - mu) * jax.lax.rsqrt(var + LN_EPS) * ln_g_ref[...] + ln_b_ref[...]
    # (n_head, c_z) contracted with (tm, c_z) over c_z -> (n_head, tm):
    # head-major result, full-lane (unmasked) stores.
    b_ref[...] = jax.lax.dot_general(
        w_bT_ref[...], zn, (((1,), (1,)), ((), ())),
        preferred_element_type=jnp.float32)


# ---------------------------------------------------------------------------
# Kernel 2: fused LayerNorm + [q|k|v|g] projection + biased MHA + gate + out
# ---------------------------------------------------------------------------
def _tri_attn_kernel(z_ref, bias_ref, ln_g_ref, ln_b_ref,
                     w_qkvg_ref, b_qkvg_ref, w_o_ref, b_o_ref,
                     out_ref, *, n_head, c_head, use_bf16):
    tr, n, c_z = z_ref.shape
    hc = n_head * c_head

    def mxu(x):  # optional bf16 MXU operands; accumulation stays f32
        return x.astype(jnp.bfloat16) if use_bf16 else x

    # ---- LayerNorm over channels (same normalization kernel 1 used) ---------
    x = z_ref[...].reshape(tr * n, c_z)
    mu = jnp.mean(x, axis=-1, keepdims=True)
    var = jnp.mean((x - mu) ** 2, axis=-1, keepdims=True)
    zn = (x - mu) * jax.lax.rsqrt(var + LN_EPS) * ln_g_ref[...] + ln_b_ref[...]

    # ---- single concatenated projection [q | k | v | g_pre] -----------------
    # (the 1/sqrt(c_head) scale is already folded into the q columns of W)
    proj = jnp.dot(mxu(zn), mxu(w_qkvg_ref[...]),
                   preferred_element_type=jnp.float32) + b_qkvg_ref[...]

    # ---- head-major relayout: (tr*n, hc) -> (tr*n_head, n, c_head) ----------
    def heads(base):
        parts = [proj[:, base + h * c_head: base + (h + 1) * c_head]
                 .reshape(tr, 1, n, c_head) for h in range(n_head)]
        return jnp.concatenate(parts, axis=1).reshape(tr * n_head, n, c_head)

    q = heads(0)
    k = heads(hc)
    v = heads(2 * hc)
    g = jax.nn.sigmoid(proj[:, 3 * hc:])                 # (tr*n, hc), f32 VPU

    # ---- one batched QK^T, bias add, softmax, PV -----------------------------
    s = jax.lax.dot_general(mxu(q), mxu(k), (((2,), (2,)), ((0,), (0,))),
                            preferred_element_type=jnp.float32)
    s = s.reshape(tr, n_head, n, n) + bias_ref[...]       # bias bcast over rows
    m = jnp.max(s, axis=-1, keepdims=True)
    p = jnp.exp(s - m)                                    # f32 exp (EUP)
    l = jnp.sum(p, axis=-1, keepdims=True)

    o = jax.lax.dot_general(mxu(p.reshape(tr * n_head, n, n)), mxu(v),
                            (((2,), (1,)), ((0,), (0,))),
                            preferred_element_type=jnp.float32)
    # deferred softmax normalisation: tiny multiply with the EUP reciprocal
    o = o * pl.reciprocal(l.reshape(tr * n_head, n, 1), approx=True)

    # ---- back to row-major (tr*n, hc), gate, output projection --------------
    o4 = o.reshape(tr, n_head, n, c_head)
    o2 = jnp.concatenate([o4[:, h].reshape(tr * n, c_head)
                          for h in range(n_head)], axis=-1)
    o2 = o2 * g
    out = jnp.dot(mxu(o2), mxu(w_o_ref[...]),
                  preferred_element_type=jnp.float32) + b_o_ref[...]
    out_ref[...] = out.reshape(tr, n, c_z)


# ---------------------------------------------------------------------------
# Wrapper
# ---------------------------------------------------------------------------
def triangle_attention(z, params, node_type, *, n_head=4, c_head=32,
                       use_bf16_matmul=False):
    if node_type not in ("starting_node", "ending_node"):
        raise ValueError(node_type)
    z = z.astype(jnp.float32)
    if node_type == "ending_node":
        # Algorithm 14 == Algorithm 13 applied to z with the pair axes swapped.
        z = jnp.swapaxes(z, 0, 1)

    n1, n2, c_z = z.shape
    assert n1 == n2, "pair representation must be square"
    n = n1
    m = n * n
    hc = n_head * c_head

    # chip-derived budgets: v7x has 64 MiB VMEM/TC, v5e/v6e have 128 MiB.
    vmem_cap = _tpu_vmem_capacity_bytes()
    vmem_limit = int(0.75 * vmem_cap)          # ~48 MiB on v7x, ~96 MiB on v5e/v6e
    row_cap = 2048 if vmem_cap >= 96 * 1024 * 1024 else 1024

    # ----- kernel 1: head-major, lane-dense triangle-bias logits -------------
    tm = _pick_row_tile(m, row_cap)
    b_hm = pl.pallas_call(
        _bias_proj_kernel,
        grid=(m // tm,),
        in_specs=[
            pl.BlockSpec((tm, c_z), lambda i: (i, 0)),
            pl.BlockSpec((1, c_z), lambda i: (0, 0)),
            pl.BlockSpec((1, c_z), lambda i: (0, 0)),
            pl.BlockSpec((n_head, c_z), lambda i: (0, 0)),
        ],
        out_specs=pl.BlockSpec((n_head, tm), lambda i: (0, i)),
        out_shape=jax.ShapeDtypeStruct((n_head, m), jnp.float32),
        compiler_params=pltpu.CompilerParams(
            dimension_semantics=("parallel",)),
    )(z.reshape(m, c_z), params["ln_g"], params["ln_b"],
      jnp.transpose(params["w_b"]))
    bias = b_hm.reshape(n_head, n, n)          # free reshape: already head-major

    # ----- kernel 2: fused attention ------------------------------------------
    # q/k/v projections are bias-free (matches the reference module); the
    # query scale is folded into w_q so the kernel never multiplies q.
    scale = 1.0 / math.sqrt(c_head)
    w_qkvg = jnp.concatenate(
        [params["w_q"] * scale, params["w_k"], params["w_v"], params["w_g"]],
        axis=1)
    b_qkvg = jnp.concatenate(
        [jnp.zeros((1, 3 * hc), jnp.float32), params["b_g"]], axis=1)

    tr = _pick_attn_rows(n, c_z, n_head, c_head, int(0.6 * vmem_cap))

    flops = int(2 * m * c_z * 4 * hc            # [q|k|v|g] projection
                + 4 * n_head * c_head * n ** 3  # QK^T + PV
                + 2 * m * hc * c_z)             # output projection
    cost = pl.CostEstimate(
        flops=flops,
        transcendentals=int(n_head * n ** 3 + m * hc + n_head * n * n),
        bytes_accessed=int(4 * (2 * m * c_z            # z in + out writeback
                                + n_head * n * n       # bias read
                                + c_z * 4 * hc + 4 * hc + hc * c_z + 4 * c_z)))

    kernel = functools.partial(_tri_attn_kernel, n_head=n_head, c_head=c_head,
                               use_bf16=use_bf16_matmul)

    def run(single_buffer_invariants):
        def inv_spec(shape):
            kwargs = {}
            if single_buffer_invariants:
                # grid-invariant operand: no need for double buffering
                kwargs["pipeline_mode"] = pl.Buffered(1)
            return pl.BlockSpec(shape, lambda *_: (0,) * len(shape), **kwargs)

        return pl.pallas_call(
            kernel,
            grid=(n // tr,),
            in_specs=[
                pl.BlockSpec((tr, n, c_z), lambda r: (r, 0, 0)),  # z row block
                inv_spec((n_head, n, n)),                          # bias
                inv_spec((1, c_z)),                                # LN gamma
                inv_spec((1, c_z)),                                # LN beta
                inv_spec((c_z, 4 * hc)),                           # W_[q|k|v|g]
                inv_spec((1, 4 * hc)),                             # b_[q|k|v|g]
                inv_spec((hc, c_z)),                               # W_o
                inv_spec((1, c_z)),                                # b_o
            ],
            out_specs=pl.BlockSpec((tr, n, c_z), lambda r: (r, 0, 0)),
            out_shape=jax.ShapeDtypeStruct((n, n, c_z), jnp.float32),
            compiler_params=pltpu.CompilerParams(
                dimension_semantics=("parallel",),
                vmem_limit_bytes=vmem_limit),
            cost_estimate=cost,
        )(z, bias, params["ln_g"], params["ln_b"],
          w_qkvg, b_qkvg, params["w_o"], params["b_o"])

    try:
        out = run(True)
    except Exception:
        # Fallback for JAX versions without BlockSpec.pipeline_mode support:
        # same kernel, default (double-buffered) invariant operands.
        out = run(False)

    if node_type == "ending_node":
        out = jnp.swapaxes(out, 0, 1)
    return out


# ---------------------------------------------------------------------------
# Pure-JAX reference (mirrors the PyTorch forward exactly)
# ---------------------------------------------------------------------------
def triangle_attention_ref(z, p, node_type, *, n_head=4, c_head=32):
    z = z.astype(jnp.float32)
    mu = jnp.mean(z, -1, keepdims=True)
    var = jnp.mean((z - mu) ** 2, -1, keepdims=True)
    zn = (z - mu) * jax.lax.rsqrt(var + LN_EPS) * p["ln_g"][0] + p["ln_b"][0]

    b = zn @ p["w_b"]                          # (N, N, H)
    b = jnp.moveaxis(b, -1, -3)                # (H, N, N)
    if node_type == "ending_node":
        b = jnp.swapaxes(b, -1, -2)

    attn_dim = -2 if node_type == "starting_node" else -3
    x = jnp.moveaxis(zn, attn_dim, -2)         # (N_batch, N_seq, c_z)

    def split_heads(t):
        t = t.reshape(t.shape[:-1] + (n_head, c_head))
        return jnp.swapaxes(t, -2, -3)         # (N_batch, H, N_seq, c)

    q = split_heads(x @ p["w_q"]) / math.sqrt(c_head)
    k = split_heads(x @ p["w_k"])
    v = split_heads(x @ p["w_v"])

    a = jnp.einsum('...qc,...kc->...qk', q, k)  # (N_batch, H, N_seq, N_seq)
    a = a + b                                   # bias broadcasts over batch
    a = jax.nn.softmax(a, axis=-1)
    o = jnp.einsum('...qk,...kc->...qc', a, v)  # (N_batch, H, N_seq, c)
    o = jnp.swapaxes(o, -2, -3)
    o = o.reshape(o.shape[:-2] + (n_head * c_head,))
    g = jax.nn.sigmoid(x @ p["w_g"] + p["b_g"][0])
    o = g * o
    o = jnp.moveaxis(o, -2, attn_dim)
    return o @ p["w_o"] + p["b_o"][0]


# ---------------------------------------------------------------------------
def init_params(key, c_z, c_head, n_head):
    hc = n_head * c_head
    ks = jax.random.split(key, 10)
    rnd = lambda k, shape, s=0.1: (s * jax.random.normal(k, shape)).astype(jnp.float32)
    return {
        "ln_g": 1.0 + rnd(ks[0], (1, c_z)),
        "ln_b": rnd(ks[1], (1, c_z)),
        "w_q": rnd(ks[2], (c_z, hc)),
        "w_k": rnd(ks[3], (c_z, hc)),
        "w_v": rnd(ks[4], (c_z, hc)),
        "w_g": rnd(ks[5], (c_z, hc)),
        "b_g": rnd(ks[6], (1, hc)),
        "w_b": rnd(ks[7], (c_z, n_head)),      # triangle bias linear (no bias)
        "w_o": rnd(ks[8], (hc, c_z)),
        "b_o": rnd(ks[9], (1, c_z)),
    }


if __name__ == "__main__":
    N_res, c_z, c_head, n_head = 16, 32, 32, 4
    key = jax.random.PRNGKey(0)
    kz, kp = jax.random.split(key)
    z = jax.random.normal(kz, (N_res, N_res, c_z), dtype=jnp.float32)
    params = init_params(kp, c_z, c_head, n_head)

    ok = True
    for node_type in ("starting_node", "ending_node"):
        out = jax.block_until_ready(
            triangle_attention(z, params, node_type, n_head=n_head, c_head=c_head))
        ref = triangle_attention_ref(z, params, node_type, n_head=n_head, c_head=c_head)
        if out.shape != z.shape:
            ok = False
        if not jnp.allclose(out, ref, rtol=1e-3, atol=1e-3):
            ok = False

    # bf16 MXU opt-in: smoke test only (f32 path above is held to 1e-3).
    out_bf16 = jax.block_until_ready(
        triangle_attention(z, params, "starting_node", n_head=n_head,
                           c_head=c_head, use_bf16_matmul=True))
    if out_bf16.shape != z.shape or not bool(jnp.isfinite(out_bf16).all()):
        ok = False

    print("KERNEL_OK" if ok else "KERNEL_MISMATCH")
</pallas_src>

<mosaic_0001>
module attributes {stable_mosaic.version = 11 : i64} {
  func.func @_bias_proj_kernel(%arg0: i32, %arg1: memref<128x32xf32, #tpu.memory_space<vmem>>, %arg2: memref<1x32xf32, #tpu.memory_space<vmem>>, %arg3: memref<1x32xf32, #tpu.memory_space<vmem>>, %arg4: memref<4x32xf32, #tpu.memory_space<vmem>>, %arg5: memref<4x128xf32, #tpu.memory_space<vmem>>) attributes {dimension_semantics = [#tpu.dimension_semantics<parallel>], iteration_bounds = array<i64: 2>, scalar_prefetch = 0 : i64, scratch_operands = 0 : i64, tpu.core_type = #tpu.core_type<tc>, window_params = [{transform_indices = @transform_0, window_bounds = array<i64: 128, 32>}, {pipeline_mode = #tpu.pipeline_mode<synchronous>, transform_indices = @transform_1, window_bounds = array<i64: 1, 32>}, {pipeline_mode = #tpu.pipeline_mode<synchronous>, transform_indices = @transform_2, window_bounds = array<i64: 1, 32>}, {pipeline_mode = #tpu.pipeline_mode<synchronous>, transform_indices = @transform_3, window_bounds = array<i64: 4, 32>}, {transform_indices = @transform_4, window_bounds = array<i64: 4, 128>}]} {
    %c0 = arith.constant 0 : index
    %c0_0 = arith.constant 0 : index
    %0 = vector.load %arg1[%c0, %c0_0] : memref<128x32xf32, #tpu.memory_space<vmem>>, vector<128x32xf32>
    %cst = arith.constant dense<0.000000e+00> : vector<128xf32>
    %1 = vector.multi_reduction <add>, %0, %cst [1] : vector<128x32xf32> to vector<128xf32>
    %2 = vector.shape_cast %1 : vector<128xf32> to vector<128x1xf32>
    %cst_1 = arith.constant 3.200000e+01 : f32
    %3 = vector.broadcast %cst_1 : f32 to vector<128x1xf32>
    %4 = arith.divf %2, %3 : vector<128x1xf32>
    %5 = vector.broadcast %4 : vector<128x1xf32> to vector<128x32xf32>
    %6 = arith.subf %0, %5 : vector<128x32xf32>
    %7 = arith.mulf %6, %6 : vector<128x32xf32>
    %cst_2 = arith.constant dense<0.000000e+00> : vector<128xf32>
    %8 = vector.multi_reduction <add>, %7, %cst_2 [1] : vector<128x32xf32> to vector<128xf32>
    %9 = vector.shape_cast %8 : vector<128xf32> to vector<128x1xf32>
    %cst_3 = arith.constant 3.200000e+01 : f32
    %10 = vector.broadcast %cst_3 : f32 to vector<128x1xf32>
    %11 = arith.divf %9, %10 : vector<128x1xf32>
    %12 = vector.broadcast %4 : vector<128x1xf32> to vector<128x32xf32>
    %13 = arith.subf %0, %12 : vector<128x32xf32>
    %cst_4 = arith.constant 9.99999974E-6 : f32
    %14 = vector.broadcast %cst_4 : f32 to vector<128x1xf32>
    %15 = arith.addf %11, %14 : vector<128x1xf32>
    %16 = math.rsqrt %15 : vector<128x1xf32>
    %17 = vector.broadcast %16 : vector<128x1xf32> to vector<128x32xf32>
    %18 = arith.mulf %13, %17 : vector<128x32xf32>
    %c0_5 = arith.constant 0 : index
    %c0_6 = arith.constant 0 : index
    %19 = vector.load %arg2[%c0_5, %c0_6] : memref<1x32xf32, #tpu.memory_space<vmem>>, vector<1x32xf32>
    %20 = vector.broadcast %19 : vector<1x32xf32> to vector<128x32xf32>
    %21 = arith.mulf %18, %20 : vector<128x32xf32>
    %c0_7 = arith.constant 0 : index
    %c0_8 = arith.constant 0 : index
    %22 = vector.load %arg3[%c0_7, %c0_8] : memref<1x32xf32, #tpu.memory_space<vmem>>, vector<1x32xf32>
    %23 = vector.broadcast %22 : vector<1x32xf32> to vector<128x32xf32>
    %24 = arith.addf %21, %23 : vector<128x32xf32>
    %c0_9 = arith.constant 0 : index
    %c0_10 = arith.constant 0 : index
    %25 = vector.load %arg4[%c0_9, %c0_10] : memref<4x32xf32, #tpu.memory_space<vmem>>, vector<4x32xf32>
    %cst_11 = arith.constant dense<0.000000e+00> : vector<4x128xf32>
    %26 = tpu.matmul %25, %24, %cst_11 {dimension_numbers = #tpu.dot_dimension_numbers<[1], [1], [0], [0], [0, 0, 1, 0], [], []>} : vector<4x32xf32>, vector<128x32xf32>, vector<4x128xf32> -> vector<4x128xf32>
    %c0_12 = arith.constant 0 : index
    %c0_13 = arith.constant 0 : index
    %27 = vector.load %arg5[%c0_12, %c0_13] : memref<4x128xf32, #tpu.memory_space<vmem>>, vector<4x128xf32>
    tpu.vector_store %arg5[%c0_12, %c0_13], %26 {strides = array<i32>} : memref<4x128xf32, #tpu.memory_space<vmem>>, vector<4x128xf32>,
    return
  }
  func.func @transform_0(%arg0: i32) -> (i32, i32) {
    %c0_i32 = arith.constant 0 : i32
    %c0_i32_0 = arith.constant 0 : i32
    return %arg0, %c0_i32 : i32, i32
  }
  func.func @transform_1(%arg0: i32) -> (i32, i32) {
    %c0_i32 = arith.constant 0 : i32
    %c0_i32_0 = arith.constant 0 : i32
    %c0_i32_1 = arith.constant 0 : i32
    return %c0_i32, %c0_i32_0 : i32, i32
  }
  func.func @transform_2(%arg0: i32) -> (i32, i32) {
    %c0_i32 = arith.constant 0 : i32
    %c0_i32_0 = arith.constant 0 : i32
    %c0_i32_1 = arith.constant 0 : i32
    return %c0_i32, %c0_i32_0 : i32, i32
  }
  func.func @transform_3(%arg0: i32) -> (i32, i32) {
    %c0_i32 = arith.constant 0 : i32
    %c0_i32_0 = arith.constant 0 : i32
    %c0_i32_1 = arith.constant 0 : i32
    return %c0_i32, %c0_i32_0 : i32, i32
  }
  func.func @transform_4(%arg0: i32) -> (i32, i32) {
    %c0_i32 = arith.constant 0 : i32
    %c0_i32_0 = arith.constant 0 : i32
    return %c0_i32, %arg0 : i32, i32
  }
}

</mosaic_0001>

<llo_original>
// kernel: tpu_custom_call.1
$region0: #{tpu_custom_call.1}
  #allocation0 [shape = 'u32[]', space=smem, size = 0x4, offset = 0x4, fixed_abs, tag = 'smem constant byte address 0x4 - core index']
  #allocation1 [shape = 'u32[144,128]{1,0:T(1,128)}', space=vmem, size = 0x12000, scoped, tag = 'internal scratch']
  %s0 = inlined_call_operand.vmem [shape: f32[256,32], index: 0, kind: input, shape index: {}]
  %s1 = inlined_call_operand.vmem [shape: f32[1,32], index: 1, kind: input, shape index: {}]
  %s2 = inlined_call_operand.vmem [shape: f32[1,32], index: 2, kind: input, shape index: {}]
  %s3 = inlined_call_operand.vmem [shape: f32[4,32], index: 3, kind: input, shape index: {}]
  %s4 = inlined_call_operand.hbm [shape: f32[4,256], index: 4, kind: output, shape index: {}]
  %s5 = sld [smem:[#allocation0]]
  $region49: #{tpu_custom_call.1} parent=0
    _
  %s7 = ssub.s32 1, %s5
  %s8 = scalar_select 0, %s7, %s5
  $region1: #{tpu_custom_call.1} parent=0
    #allocation2 [shape = 'u8[4096]{0}', space=vmem, size = 0x1000, scoped, tag = 'output window, operand 0']
    #allocation3 [shape = 's32[2]{0}', space=sflag, size = 0x8, scoped, tag = 'scoped memory for tpu_custom_call.1']
    %9 = vsyncpa [#allocation3], 0
    %s10 = scalar_lea.sflag [#allocation3], 1
    %11 = vsyncpa %s10, 0
    loop: start=0, step=1, limit=4
    $region2: #{tpu_custom_call.1} parent=1 // loop_pre_header
      _
    $region3: #{tpu_custom_call.1} parent=1 // loop_header
      %s13 = sphi 0, %s17
      %p14 = scmp.ge.s32.totalorder %s13, 4
      %s23 = sphi 0, %s25
      %s26 = sphi 0, %s23
      %s27 = sphi 0, %s26
      %s43 = sphi 0, %s27
      %s47 = sphi 0, %s47
      %s49 = sphi 0, %s47
      %s50 = sphi 0, %s49
      %s64 = sphi 0, %s50
      %s68 = sphi 0, %s68
      %s70 = sphi 0, %s68
      %s71 = sphi 0, %s70
      %s85 = sphi 0, %s71
      %s89 = sphi 0, %s89
      %s91 = sphi 0, %s89
      %s92 = sphi 0, %s91
      %s106 = sphi 0, %s92
      %s112 = sphi 0, %s114
      %s115 = sphi 0, %s112
      %s116 = sphi 0, %s115
      %s132 = sphi 0, %s116
    $region4: #{tpu_custom_call.1} parent=1 // loop_header_branch
      %16 = sbr.rel (%p14) target = $region8
    $region5: #{tpu_custom_call.1} parent=1 // loop_body
      %s18 = ssub.s32 %s13, 1
      %s19 = ssub.s32 %s13, 2
      %s20 = sadd.s32 %s13, 1
      %s21 = ssub.s32 %s13, %s20
      %p22 = scmp.eq.s32.totalorder %s21, 0
      %s24 = sadd.s32 %s23, 1
      %s25 = scalar_select %p22, %s23, %s24
      %p28 = pneg %p22
      %p29 = scmp.eq.s32.totalorder %s13, 1
      %p30 = por %p28, %p29
      %p31 = scmp.ne.s32.totalorder %s23, %s26
      %p32 = scmp.eq.s32.totalorder %s13, 0
      %p33 = por %p31, %p32
      %p34 = scmp.ne.s32.totalorder %s23, %s26
      %p35 = scmp.eq.s32.totalorder %s18, 1
      %p36 = por %p34, %p35
      %p37 = scmp.ne.s32.totalorder %s26, %s27
      %p38 = scmp.eq.s32.totalorder %s18, 0
      %p39 = por %p37, %p38
      %p40 = scmp.ne.s32.totalorder %s26, %s27
      %p41 = scmp.eq.s32.totalorder %s19, 1
      %p42 = por %p40, %p41
      %p44 = scmp.ne.s32.totalorder %s27, %s43
      %p45 = scmp.eq.s32.totalorder %s19, 0
      %p46 = por %p44, %p45
      %s48 = sadd.s32 %s47, 1
      %p51 = scmp.eq.s32.totalorder %s13, 1
      %p52 = scmp.ne.s32.totalorder %s47, %s49
      %p53 = scmp.eq.s32.totalorder %s13, 0
      %p54 = por %p52, %p53
      %p55 = scmp.ne.s32.totalorder %s47, %s49
      %p56 = scmp.eq.s32.totalorder %s18, 1
      %p57 = por %p55, %p56
      %p58 = scmp.ne.s32.totalorder %s49, %s50
      %p59 = scmp.eq.s32.totalorder %s18, 0
      %p60 = por %p58, %p59
      %p61 = scmp.ne.s32.totalorder %s49, %s50
      %p62 = scmp.eq.s32.totalorder %s19, 1
      %p63 = por %p61, %p62
      %p65 = scmp.ne.s32.totalorder %s50, %s64
      %p66 = scmp.eq.s32.totalorder %s19, 0
      %p67 = por %p65, %p66
      %s69 = sadd.s32 %s68, 1
      %p72 = scmp.eq.s32.totalorder %s13, 1
      %p73 = scmp.ne.s32.totalorder %s68, %s70
      %p74 = scmp.eq.s32.totalorder %s13, 0
      %p75 = por %p73, %p74
      %p76 = scmp.ne.s32.totalorder %s68, %s70
      %p77 = scmp.eq.s32.totalorder %s18, 1
      %p78 = por %p76, %p77
      %p79 = scmp.ne.s32.totalorder %s70, %s71
      %p80 = scmp.eq.s32.totalorder %s18, 0
      %p81 = por %p79, %p80
      %p82 = scmp.ne.s32.totalorder %s70, %s71
      %p83 = scmp.eq.s32.totalorder %s19, 1
      %p84 = por %p82, %p83
      %p86 = scmp.ne.s32.totalorder %s71, %s85
      %p87 = scmp.eq.s32.totalorder %s19, 0
      %p88 = por %p86, %p87
      %s90 = sadd.s32 %s89, 1
      %p93 = scmp.eq.s32.totalorder %s13, 1
      %p94 = scmp.ne.s32.totalorder %s89, %s91
      %p95 = scmp.eq.s32.totalorder %s13, 0
      %p96 = por %p94, %p95
      %p97 = scmp.ne.s32.totalorder %s89, %s91
      %p98 = scmp.eq.s32.totalorder %s18, 1
      %p99 = por %p97, %p98
      %p100 = scmp.ne.s32.totalorder %s91, %s92
      %p101 = scmp.eq.s32.totalorder %s18, 0
      %p102 = por %p100, %p101
      %p103 = scmp.ne.s32.totalorder %s91, %s92
      %p104 = scmp.eq.s32.totalorder %s19, 1
      %p105 = por %p103, %p104
      %p107 = scmp.ne.s32.totalorder %s92, %s106
      %p108 = scmp.eq.s32.totalorder %s19, 0
      %p109 = por %p107, %p108
      %s110 = ssub.s32 %s13, %s20
      %p111 = scmp.eq.s32.totalorder %s110, 0
      %s113 = sadd.s32 %s112, 1
      %s114 = scalar_select %p111, %s112, %s113
      %p117 = pneg %p111
      %p118 = scmp.eq.s32.totalorder %s13, 1
      %p119 = por %p117, %p118
      %p120 = scmp.ne.s32.totalorder %s112, %s115
      %p121 = scmp.eq.s32.totalorder %s13, 0
      %p122 = por %p120, %p121
      %p123 = scmp.ne.s32.totalorder %s112, %s115
      %p124 = scmp.eq.s32.totalorder %s18, 1
      %p125 = por %p123, %p124
      %p126 = scmp.ne.s32.totalorder %s115, %s116
      %p127 = scmp.eq.s32.totalorder %s18, 0
      %p128 = por %p126, %p127
      %p129 = scmp.ne.s32.totalorder %s115, %s116
      %p130 = scmp.eq.s32.totalorder %s19, 1
      %p131 = por %p129, %p130
      %p133 = scmp.ne.s32.totalorder %s116, %s132
      %p134 = scmp.eq.s32.totalorder %s19, 0
      %p135 = por %p133, %p134
      %p136 = scmp.le.s32.totalorder 1, %s13
      %p137 = scmp.lt.s32.totalorder %s13, 3
      %p138 = pnand %p136, %p137
      %p139 = pneg %p138
      // Predicated region
      $region9: #{tpu_custom_call.1} parent=5 // pred_check
        _
      $region10: #{tpu_custom_call.1} parent=5 // pred_check_branch
        %141 = sbr.rel (%p138) target = $region12
      $region11: #{tpu_custom_call.1} parent=5 // pred_region
        %s142 = ssub.s32 %s13, 1
        // Predicated region
        $region13: #{tpu_custom_call.1} parent=11 // pred_check
          %p143 = pneg %p60
        $region14: #{tpu_custom_call.1} parent=11 // pred_check_branch
          %145 = sbr.rel (%p143) target = $region16
        $region15: #{tpu_custom_call.1} parent=11 // pred_region
          _
        $region16: #{tpu_custom_call.1} parent=11 // pred_fallthru
          _
        // Predicated region
        $region17: #{tpu_custom_call.1} parent=11 // pred_check
          %p146 = pneg %p81
        $region18: #{tpu_custom_call.1} parent=11 // pred_check_branch
          %148 = sbr.rel (%p146) target = $region20
        $region19: #{tpu_custom_call.1} parent=11 // pred_region
          _
        $region20: #{tpu_custom_call.1} parent=11 // pred_fallthru
          _
        // Predicated region
        $region21: #{tpu_custom_call.1} parent=11 // pred_check
          %p149 = pneg %p102
        $region22: #{tpu_custom_call.1} parent=11 // pred_check_branch
          %151 = sbr.rel (%p149) target = $region24
        $region23: #{tpu_custom_call.1} parent=11 // pred_region
          _
        $region24: #{tpu_custom_call.1} parent=11 // pred_fallthru
          _
      $region12: #{tpu_custom_call.1} parent=5 // pred_fallthru
        _
      %p152 = scmp.lt.s32.totalorder %s13, 2
      // Predicated region
      $region25: #{tpu_custom_call.1} parent=5 // pred_check
        %p153 = pneg %p152
      $region26: #{tpu_custom_call.1} parent=5 // pred_check_branch
        %155 = sbr.rel (%p153) target = $region28
      $region27: #{tpu_custom_call.1} parent=5 // pred_region
        // Predicated region
        $region29: #{tpu_custom_call.1} parent=27 // pred_check
          %p156 = pneg %p33
        $region30: #{tpu_custom_call.1} parent=27 // pred_check_branch
          %158 = sbr.rel (%p156) target = $region32
        $region31: #{tpu_custom_call.1} parent=27 // pred_region
          %s159 = smul.u32 16, %s13
          %p160 = scmp.lt.s32.totalorder %s159, 31
          %s161 = scalar_select %p160, %s159, 31
          %s162 = smul.addr %s161, 8
          %s163 = scalar_lea.vmem %s0, %s162
          %s164 = smul.u32 16, %s13
        $region32: #{tpu_custom_call.1} parent=27 // pred_fallthru
          _
      $region28: #{tpu_custom_call.1} parent=5 // pred_fallthru
        _
      %p165 = scmp.le.s32.totalorder 1, %s13
      %p166 = scmp.lt.s32.totalorder %s13, 3
      %p167 = pnand %p165, %p166
      %p168 = pneg %p167
      // Predicated region
      $region33: #{tpu_custom_call.1} parent=5 // pred_check
        _
      $region34: #{tpu_custom_call.1} parent=5 // pred_check_branch
        %170 = sbr.rel (%p167) target = $region36
      $region35: #{tpu_custom_call.1} parent=5 // pred_region
        %s171 = ssub.s32 %s13, 1
        %s172 = smul.u32 16, %s18
        %p173 = scmp.lt.s32.totalorder %s172, 31
        %s174 = scalar_select %p173, %s172, 31
        %s175 = smul.addr %s174, 8
        %s176 = scalar_lea.vmem %s0, %s175
        %p177 = pneg %p39
        %p178 = pneg %p36
        %p179 = pneg %p60
        %p180 = pneg %p57
        %p181 = pneg %p81
        %p182 = pneg %p78
        %p183 = pneg %p102
        %p184 = pneg %p99
        %p185 = pneg %p128
        %p186 = pneg %p125
        %s187 = sand.u32 %s115, 1
        %s188 = scalar_lea.sflag [#allocation3], %s187
        %s189 = sand.u32 %s115, 1
        %s190 = smul.addr %s189, 4
        %s191 = scalar_lea.vmem [#allocation2], %s190
        %s192 = smul.u32 16, %s18
        %p193 = scmp.lt.s32.totalorder %s192, 31
        %s194 = scalar_select %p193, %s192, 31
        %s195 = smul.addr %s194, 8
        %s196 = scalar_lea.vmem %s0, %s195
        %s197 = smul.u32 16, %s18
        %v198 = vld [vmem:[%s196] sm:$0xff]
        %v199 = vld [vmem:[%s196 + $0x8] sm:$0xff]
        %v200 = vld [vmem:[%s196 + $0x10] sm:$0xff]
        %v201 = vld [vmem:[%s196 + $0x18] sm:$0xff]
        %v202 = vld [vmem:[%s196 + $0x20] sm:$0xff]
        %v203 = vld [vmem:[%s196 + $0x28] sm:$0xff]
        %v204 = vld [vmem:[%s196 + $0x30] sm:$0xff]
        %v205 = vld [vmem:[%s196 + $0x38] sm:$0xff]
        %v206 = vld [vmem:[%s196 + $0x40] sm:$0xff]
        %v207 = vld [vmem:[%s196 + $0x48] sm:$0xff]
        %v208 = vld [vmem:[%s196 + $0x50] sm:$0xff]
        %v209 = vld [vmem:[%s196 + $0x58] sm:$0xff]
        %v210 = vld [vmem:[%s196 + $0x60] sm:$0xff]
        %v211 = vld [vmem:[%s196 + $0x68] sm:$0xff]
        %v212 = vld [vmem:[%s196 + $0x70] sm:$0xff]
        %v213 = vld [vmem:[%s196 + $0x78] sm:$0xff]
        %vm214 = vcmask 261120
        %v215 = vsel %vm214, %v198, 0.0
        %216 = vadd.xlane.f32.xlu0 %v215
        %v217 = vpop.xlane.xlu0 %216
        %v218 = vsel %vm214, %v199, 0.0
        %219 = vadd.xlane.f32.xlu0 %v218
        %v220 = vpop.xlane.xlu0 %219
        %v221 = vsel %vm214, %v200, 0.0
        %222 = vadd.xlane.f32.xlu0 %v221
        %v223 = vpop.xlane.xlu0 %222
        %v224 = vsel %vm214, %v201, 0.0
        %225 = vadd.xlane.f32.xlu0 %v224
        %v226 = vpop.xlane.xlu0 %225
        %v227 = vsel %vm214, %v202, 0.0
        %228 = vadd.xlane.f32.xlu0 %v227
        %v229 = vpop.xlane.xlu0 %228
        %v230 = vsel %vm214, %v203, 0.0
        %231 = vadd.xlane.f32.xlu0 %v230
        %v232 = vpop.xlane.xlu0 %231
        %v233 = vsel %vm214, %v204, 0.0
        %234 = vadd.xlane.f32.xlu0 %v233
        %v235 = vpop.xlane.xlu0 %234
        %v236 = vsel %vm214, %v205, 0.0
        %237 = vadd.xlane.f32.xlu0 %v236
        %v238 = vpop.xlane.xlu0 %237
        %v239 = vsel %vm214, %v206, 0.0
        %240 = vadd.xlane.f32.xlu0 %v239
        %v241 = vpop.xlane.xlu0 %240
        %v242 = vsel %vm214, %v207, 0.0
        %243 = vadd.xlane.f32.xlu0 %v242
        %v244 = vpop.xlane.xlu0 %243
        %v245 = vsel %vm214, %v208, 0.0
        %246 = vadd.xlane.f32.xlu0 %v245
        %v247 = vpop.xlane.xlu0 %246
        %v248 = vsel %vm214, %v209, 0.0
        %249 = vadd.xlane.f32.xlu0 %v248
        %v250 = vpop.xlane.xlu0 %249
        %v251 = vsel %vm214, %v210, 0.0
        %252 = vadd.xlane.f32.xlu0 %v251
        %v253 = vpop.xlane.xlu0 %252
        %v254 = vsel %vm214, %v211, 0.0
        %255 = vadd.xlane.f32.xlu0 %v254
        %v256 = vpop.xlane.xlu0 %255
        %v257 = vsel %vm214, %v212, 0.0
        %258 = vadd.xlane.f32.xlu0 %v257
        %v259 = vpop.xlane.xlu0 %258
        %v260 = vsel %vm214, %v213, 0.0
        %261 = vadd.xlane.f32.xlu0 %v260
        %v262 = vpop.xlane.xlu0 %261
        %v263 = vrcp.pop 32.0
        %v264 = vmul.f32 %v217, %v263
        %v265 = vmul.f32 %v220, %v263
        %v266 = vmul.f32 %v223, %v263
        %v267 = vmul.f32 %v226, %v263
        %v268 = vmul.f32 %v229, %v263
        %v269 = vmul.f32 %v232, %v263
        %v270 = vmul.f32 %v235, %v263
        %v271 = vmul.f32 %v238, %v263
        %v272 = vmul.f32 %v241, %v263
        %v273 = vmul.f32 %v244, %v263
        %v274 = vmul.f32 %v247, %v263
        %v275 = vmul.f32 %v250, %v263
        %v276 = vmul.f32 %v253, %v263
        %v277 = vmul.f32 %v256, %v263
        %v278 = vmul.f32 %v259, %v263
        %v279 = vmul.f32 %v262, %v263
        %v280 = vsub.f32 %v198, %v264
        %v281 = vsub.f32 %v199, %v265
        %v282 = vsub.f32 %v200, %v266
        %v283 = vsub.f32 %v201, %v267
        %v284 = vsub.f32 %v202, %v268
        %v285 = vsub.f32 %v203, %v269
        %v286 = vsub.f32 %v204, %v270
        %v287 = vsub.f32 %v205, %v271
        %v288 = vsub.f32 %v206, %v272
        %v289 = vsub.f32 %v207, %v273
        %v290 = vsub.f32 %v208, %v274
        %v291 = vsub.f32 %v209, %v275
        %v292 = vsub.f32 %v210, %v276
        %v293 = vsub.f32 %v211, %v277
        %v294 = vsub.f32 %v212, %v278
        %v295 = vsub.f32 %v213, %v279
        %v296 = vmul.f32 %v280, %v280
        %v297 = vmul.f32 %v281, %v281
        %v298 = vmul.f32 %v282, %v282
        %v299 = vmul.f32 %v283, %v283
        %v300 = vmul.f32 %v284, %v284
        %v301 = vmul.f32 %v285, %v285
        %v302 = vmul.f32 %v286, %v286
        %v303 = vmul.f32 %v287, %v287
        %v304 = vmul.f32 %v288, %v288
        %v305 = vmul.f32 %v289, %v289
        %v306 = vmul.f32 %v290, %v290
        %v307 = vmul.f32 %v291, %v291
        %v308 = vmul.f32 %v292, %v292
        %v309 = vmul.f32 %v293, %v293
        %v310 = vmul.f32 %v294, %v294
        %v311 = vmul.f32 %v295, %v295
        %v312 = vsel %vm214, %v296, 0.0
        %313 = vadd.xlane.f32.xlu0 %v312
        %v314 = vpop.xlane.xlu0 %313
        %v315 = vsel %vm214, %v297, 0.0
        %316 = vadd.xlane.f32.xlu0 %v315
        %v317 = vpop.xlane.xlu0 %316
        %v318 = vsel %vm214, %v298, 0.0
        %319 = vadd.xlane.f32.xlu0 %v318
        %v320 = vpop.xlane.xlu0 %319
        %v321 = vsel %vm214, %v299, 0.0
        %322 = vadd.xlane.f32.xlu0 %v321
        %v323 = vpop.xlane.xlu0 %322
        %v324 = vsel %vm214, %v300, 0.0
        %325 = vadd.xlane.f32.xlu0 %v324
        %v326 = vpop.xlane.xlu0 %325
        %v327 = vsel %vm214, %v301, 0.0
        %328 = vadd.xlane.f32.xlu0 %v327
        %v329 = vpop.xlane.xlu0 %328
        %v330 = vsel %vm214, %v302, 0.0
        %331 = vadd.xlane.f32.xlu0 %v330
        %v332 = vpop.xlane.xlu0 %331
        %v333 = vsel %vm214, %v303, 0.0
        %334 = vadd.xlane.f32.xlu0 %v333
        %v335 = vpop.xlane.xlu0 %334
        %v336 = vsel %vm214, %v304, 0.0
        %337 = vadd.xlane.f32.xlu0 %v336
        %v338 = vpop.xlane.xlu0 %337
        %v339 = vsel %vm214, %v305, 0.0
        %340 = vadd.xlane.f32.xlu0 %v339
        %v341 = vpop.xlane.xlu0 %340
        %v342 = vsel %vm214, %v306, 0.0
        %343 = vadd.xlane.f32.xlu0 %v342
        %v344 = vpop.xlane.xlu0 %343
        %v345 = vsel %vm214, %v307, 0.0
        %346 = vadd.xlane.f32.xlu0 %v345
        %v347 = vpop.xlane.xlu0 %346
        %v348 = vsel %vm214, %v308, 0.0
        %349 = vadd.xlane.f32.xlu0 %v348
        %v350 = vpop.xlane.xlu0 %349
        %v351 = vsel %vm214, %v309, 0.0
        %352 = vadd.xlane.f32.xlu0 %v351
        %v353 = vpop.xlane.xlu0 %352
        %v354 = vsel %vm214, %v310, 0.0
        %355 = vadd.xlane.f32.xlu0 %v354
        %v356 = vpop.xlane.xlu0 %355
        %v357 = vsel %vm214, %v311, 0.0
        %358 = vadd.xlane.f32.xlu0 %v357
        %v359 = vpop.xlane.xlu0 %358
        %v360 = vmul.f32 %v314, %v263
        %v361 = vmul.f32 %v317, %v263
        %v362 = vmul.f32 %v320, %v263
        %v363 = vmul.f32 %v323, %v263
        %v364 = vmul.f32 %v326, %v263
        %v365 = vmul.f32 %v329, %v263
        %v366 = vmul.f32 %v332, %v263
        %v367 = vmul.f32 %v335, %v263
        %v368 = vmul.f32 %v338, %v263
        %v369 = vmul.f32 %v341, %v263
        %v370 = vmul.f32 %v344, %v263
        %v371 = vmul.f32 %v347, %v263
        %v372 = vmul.f32 %v350, %v263
        %v373 = vmul.f32 %v353, %v263
        %v374 = vmul.f32 %v356, %v263
        %v375 = vmul.f32 %v359, %v263
        %v376 = vadd.f32 %v360, 1e-05
        %v377 = vadd.f32 %v361, 1e-05
        %v378 = vadd.f32 %v362, 1e-05
        %v379 = vadd.f32 %v363, 1e-05
        %v380 = vadd.f32 %v364, 1e-05
        %v381 = vadd.f32 %v365, 1e-05
        %v382 = vadd.f32 %v366, 1e-05
        %v383 = vadd.f32 %v367, 1e-05
        %v384 = vadd.f32 %v368, 1e-05
        %v385 = vadd.f32 %v369, 1e-05
        %v386 = vadd.f32 %v370, 1e-05
        %v387 = vadd.f32 %v371, 1e-05
        %v388 = vadd.f32 %v372, 1e-05
        %v389 = vadd.f32 %v373, 1e-05
        %v390 = vadd.f32 %v374, 1e-05
        %v391 = vadd.f32 %v375, 1e-05
        %v392 = vrsqrt.pop %v376
        %v393 = vrsqrt.pop %v377
        %v394 = vrsqrt.pop %v378
        %v395 = vrsqrt.pop %v379
        %v396 = vrsqrt.pop %v380
        %v397 = vrsqrt.pop %v381
        %v398 = vrsqrt.pop %v382
        %v399 = vrsqrt.pop %v383
        %v400 = vrsqrt.pop %v384
        %v401 = vrsqrt.pop %v385
        %v402 = vrsqrt.pop %v386
        %v403 = vrsqrt.pop %v387
        %v404 = vrsqrt.pop %v388
        %v405 = vrsqrt.pop %v389
        %v406 = vrsqrt.pop %v390
        %v407 = vrsqrt.pop %v391
        %v408 = vmul.f32 %v280, %v392
        %v409 = vmul.f32 %v281, %v393
        %v410 = vmul.f32 %v282, %v394
        %v411 = vmul.f32 %v283, %v395
        %v412 = vmul.f32 %v284, %v396
        %v413 = vmul.f32 %v285, %v397
        %v414 = vmul.f32 %v286, %v398
        %v415 = vmul.f32 %v287, %v399
        %v416 = vmul.f32 %v288, %v400
        %v417 = vmul.f32 %v289, %v401
        %v418 = vmul.f32 %v290, %v402
        %v419 = vmul.f32 %v291, %v403
        %v420 = vmul.f32 %v292, %v404
        %v421 = vmul.f32 %v293, %v405
        %v422 = vmul.f32 %v294, %v406
        %v423 = vmul.f32 %v295, %v407
        %v424 = vld [vmem:[%s1] sm:$0x1]
        %v426 = vlaneseq
        %v427 = vshrl.u32 %v426, 7
        %v428 = vsub.s32 0, %v427
        %v429 = vrot.slane %v424, %v428
        %v431 = vmul.f32 %v408, %v429
        %v432 = vmul.f32 %v409, %v429
        %v433 = vmul.f32 %v410, %v429
        %v434 = vmul.f32 %v411, %v429
        %v435 = vmul.f32 %v412, %v429
        %v436 = vmul.f32 %v413, %v429
        %v437 = vmul.f32 %v414, %v429
        %v438 = vmul.f32 %v415, %v429
        %v439 = vmul.f32 %v416, %v429
        %v440 = vmul.f32 %v417, %v429
        %v441 = vmul.f32 %v418, %v429
        %v442 = vmul.f32 %v419, %v429
        %v443 = vmul.f32 %v420, %v429
        %v444 = vmul.f32 %v421, %v429
        %v445 = vmul.f32 %v422, %v429
        %v446 = vmul.f32 %v423, %v429
        %v447 = vld [vmem:[%s2] sm:$0x1]
        %v449 = vlaneseq
        %v450 = vshrl.u32 %v449, 7
        %v451 = vsub.s32 0, %v450
        %v452 = vrot.slane %v447, %v451
        %v454 = vadd.f32 %v431, %v452
        %v455 = vadd.f32 %v432, %v452
        %v456 = vadd.f32 %v433, %v452
        %v457 = vadd.f32 %v434, %v452
        %v458 = vadd.f32 %v435, %v452
        %v459 = vadd.f32 %v436, %v452
        %v460 = vadd.f32 %v437, %v452
        %v461 = vadd.f32 %v438, %v452
        %v462 = vadd.f32 %v439, %v452
        %v463 = vadd.f32 %v440, %v452
        %v464 = vadd.f32 %v441, %v452
        %v465 = vadd.f32 %v442, %v452
        %v466 = vadd.f32 %v443, %v452
        %v467 = vadd.f32 %v444, %v452
        %v468 = vadd.f32 %v445, %v452
        %v469 = vadd.f32 %v446, %v452
        %v470 = vld [vmem:[%s3] sm:$0xf]
        %v472 = vsel %vm214, %v470, 0
        %v475 = vsel %vm214, %v454, 0
        %v478 = vsel %vm214, %v455, 0
        %v481 = vsel %vm214, %v456, 0
        %v484 = vsel %vm214, %v457, 0
        %v487 = vsel %vm214, %v458, 0
        %v490 = vsel %vm214, %v459, 0
        %v493 = vsel %vm214, %v460, 0
        %v496 = vsel %vm214, %v461, 0
        %v499 = vsel %vm214, %v462, 0
        %v502 = vsel %vm214, %v463, 0
        %v505 = vsel %vm214, %v464, 0
        %v508 = vsel %vm214, %v465, 0
        %v511 = vsel %vm214, %v466, 0
        %v514 = vsel %vm214, %v467, 0
        %v517 = vsel %vm214, %v468, 0
        %v520 = vsel %vm214, %v469, 0
        %522 = vmatprep.subr.mxu0 0.0
        %523 = vmatpush1.xpose.msra.mxu0 %v475
        %524 = vmatprep.subr.mxu0 0.0
        %525 = vmatpush1.xpose.msra.mxu0 %v478
        %526 = vmatprep.subr.mxu0 0.0
        %527 = vmatpush1.xpose.msra.mxu0 %v481
        %528 = vmatprep.subr.mxu0 0.0
        %529 = vmatpush1.xpose.msra.mxu0 %v484
        %530 = vmatprep.subr.mxu0 0.0
        %531 = vmatpush1.xpose.msra.mxu0 %v487
        %532 = vmatprep.subr.mxu0 0.0
        %533 = vmatpush1.xpose.msra.mxu0 %v490
        %534 = vmatprep.subr.mxu0 0.0
        %535 = vmatpush1.xpose.msra.mxu0 %v493
        %536 = vmatprep.subr.mxu0 0.0
        %537 = vmatpush1.xpose.msra.mxu0 %v496
        %538 = vmatprep.subr.mxu0 0.0
        %539 = vmatpush1.xpose.msra.mxu0 %v499
        %540 = vmatprep.subr.mxu0 0.0
        %541 = vmatpush1.xpose.msra.mxu0 %v502
        %542 = vmatprep.subr.mxu0 0.0
        %543 = vmatpush1.xpose.msra.mxu0 %v505
        %544 = vmatprep.subr.mxu0 0.0
        %545 = vmatpush1.xpose.msra.mxu0 %v508
        %546 = vmatprep.subr.mxu0 0.0
        %547 = vmatpush1.xpose.msra.mxu0 %v511
        %548 = vmatprep.subr.mxu0 0.0
        %549 = vmatpush1.xpose.msra.mxu0 %v514
        %550 = vmatprep.subr.mxu0 0.0
        %551 = vmatpush1.xpose.msra.mxu0 %v517
        %552 = vmatprep.subr.mxu0 0.0
        %553 = vmatpush1.xpose.msra.mxu0 %v520
        %554 = vmatprep.subr.mxu0 0.0
        %555 = vmatpush1.xpose.msra.mxu0 0.0
        %556 = vmatprep.subr.mxu0 0.0
        %557 = vmatpush1.xpose.msra.mxu0 0.0
        %558 = vmatprep.subr.mxu0 0.0
        %559 = vmatpush1.xpose.msra.mxu0 0.0
        %560 = vmatprep.subr.mxu0 0.0
        %561 = vmatpush1.xpose.msra.mxu0 0.0
        %562 = vmatprep.subr.mxu0 0.0
        %563 = vmatpush1.xpose.msra.mxu0 0.0
        %564 = vmatprep.subr.mxu0 0.0
        %565 = vmatpush1.xpose.msra.mxu0 0.0
        %566 = vmatprep.subr.mxu0 0.0
        %567 = vmatpush1.xpose.msra.mxu0 0.0
        %568 = vmatprep.subr.mxu0 0.0
        %569 = vmatpush1.xpose.msra.mxu0 0.0
        %570 = vmatprep.subr.mxu0 0.0
        %571 = vmatpush1.xpose.msra.mxu0 0.0
        %572 = vmatprep.subr.mxu0 0.0
        %573 = vmatpush1.xpose.msra.mxu0 0.0
        %574 = vmatprep.subr.mxu0 0.0
        %575 = vmatpush1.xpose.msra.mxu0 0.0
        %576 = vmatprep.subr.mxu0 0.0
        %577 = vmatpush1.xpose.msra.mxu0 0.0
        %578 = vmatprep.subr.mxu0 0.0
        %579 = vmatpush1.xpose.msra.mxu0 0.0
        %580 = vmatprep.subr.mxu0 0.0
        %581 = vmatpush1.xpose.msra.mxu0 0.0
        %582 = vmatprep.subr.mxu0 0.0
        %583 = vmatpush1.xpose.msra.mxu0 0.0
        %584 = vmatprep.subr.mxu0 0.0
        %585 = vmatpush1.xpose.msra.mxu0 0.0
        %586 = vmatprep.mubr.f32.mxu0 0.0
        %587 = vmatmul.mubr.f32.gmra.mrb[0].mxu0 %v472
        %v588 = vpop.f32.mrb[0].mxu0
        %v589 = vadd.f32 0.0, %v588
        %v590 = vpop.f32.mrb[0].mxu0
        %591 = vdwg.mxu0
        %592 = vst [vmem:[%s191] sm:$0xf] %v589
        %s593 = sand.u32 %s115, 1
        %s594 = scalar_lea.sflag [#allocation3], %s593
        %s595 = sand.u32 %s115, 1
        %s596 = smul.addr %s595, 4
        %s597 = scalar_lea.vmem [#allocation2], %s596
        // Predicated region
        $region37: #{tpu_custom_call.1} parent=35 // pred_check
          %p598 = pneg %p125
        $region38: #{tpu_custom_call.1} parent=35 // pred_check_branch
          %600 = sbr.rel (%p598) target = $region40
        $region39: #{tpu_custom_call.1} parent=35 // pred_region
          %s602 = ssub.s32 64, 64
          %603 = vsyncadd %s594, %s602
          %s604 = smul.addr %s18, 64
          %s605 = scalar_lea.hbm %s4, %s604
          %s607 = sshll.u32 %s597, 4
          %s608 = int_to_ptr.vmem [resolvable:$true] %s607
          %610 = dma.vmem_to_hbm [thread:$0]  %s608, 64, %s605, %s594
        $region40: #{tpu_custom_call.1} parent=35 // pred_fallthru
          _
      $region36: #{tpu_custom_call.1} parent=5 // pred_fallthru
        _
      %p611 = scmp.le.s32.totalorder 2, %s13
      // Predicated region
      $region41: #{tpu_custom_call.1} parent=5 // pred_check
        %p612 = pneg %p611
      $region42: #{tpu_custom_call.1} parent=5 // pred_check_branch
        %614 = sbr.rel (%p612) target = $region44
      $region43: #{tpu_custom_call.1} parent=5 // pred_region
        %s615 = ssub.s32 %s13, 2
        // Predicated region
        $region45: #{tpu_custom_call.1} parent=43 // pred_check
          %p616 = pneg %p131
        $region46: #{tpu_custom_call.1} parent=43 // pred_check_branch
          %618 = sbr.rel (%p616) target = $region48
        $region47: #{tpu_custom_call.1} parent=43 // pred_region
          %s619 = sand.u32 %s116, 1
          %s620 = scalar_lea.sflag [#allocation3], %s619
          %s621 = sand.u32 %s116, 1
          %s622 = smul.addr %s621, 4
          %s623 = scalar_lea.vmem [#allocation2], %s622
          %624 = dma.done %s620, 64
        $region48: #{tpu_custom_call.1} parent=43 // pred_fallthru
          _
      $region44: #{tpu_custom_call.1} parent=5 // pred_fallthru
        _
    $region6: #{tpu_custom_call.1} parent=1 // loop_footer
      %s17 = sadd.s32 1, %s13
    $region7: #{tpu_custom_call.1} parent=1 // loop_footer_branch
      %12 = sbr.rel target = $region3
    $region8: #{tpu_custom_call.1} parent=1 // loop_exit
      _
    %625 = vsyncpa [#allocation3], 1
    %s626 = scalar_lea.sflag [#allocation3], 1
    %627 = vsyncpa %s626, 1

</llo_original>
